<compile_context>
chip_gen: v6e
topology: v6e:2x2x1
jax: 0.10.0
libtpu: 0.0.40
codegen_flags: <defaults>
</compile_context>

<pallas_src>
import math

import jax
import jax.numpy as jnp
from jax import lax
from jax.experimental import pallas as pl
from jax.experimental.pallas import tpu as pltpu


def _round_up(x, m):
    return ((x + m - 1) // m) * m


def _choose_tiling(batch):
    """Pick (grid, tile_rows): balanced tiles, rounded to 8 rows, <= 1024 rows."""
    grid = 2 if batch >= 16 else 1          # 2 tiles -> balanced megacore split on v7x
    tile = _round_up(pl.cdiv(batch, grid), 8)
    while tile > 1024:                      # keep per-step VMEM / pipeline reasonable
        grid *= 2
        tile = _round_up(pl.cdiv(batch, grid), 8)
    return grid, tile


def _value_kernel(x_ref, w1_ref, b1_ref, w2_ref, b2_ref, wv_ref, bv_ref, out_ref):
    # ---- fc1 + ReLU: MXU bf16 matmul, f32 accumulate --------------------------
    # K = input_dim is tiny, but the MXU has huge slack in this kernel, so a
    # short-K MXU pass beats a VALU/XLU broadcast-FMA chain on every generation.
    x = x_ref[...].astype(jnp.bfloat16)                           # (TILE_B, D)
    h1 = jnp.dot(x, w1_ref[...], preferred_element_type=jnp.float32) + b1_ref[...]
    h1 = jnp.maximum(h1, 0.0).astype(jnp.bfloat16)                # (TILE_B, F1)

    # ---- fc2 + ReLU: dominant FLOP term, native bf16 MXU ----------------------
    h2 = jnp.dot(h1, w2_ref[...], preferred_element_type=jnp.float32) + b2_ref[...]
    h2 = jnp.maximum(h2, 0.0).astype(jnp.bfloat16)                # (TILE_B, F2)

    # ---- value head: contract feature axis so the result is a lane-dense row --
    # (1,F2) x (TILE_B,F2)^T -> (1, TILE_B) on the MXU: no cross-lane reduce and
    # no lane-sparse masked stores.
    v = lax.dot_general(wv_ref[...], h2,
                        dimension_numbers=(((1,), (1,)), ((), ())),
                        preferred_element_type=jnp.float32)       # (1, TILE_B)
    out_ref[0] = v + bv_ref[...]


@jax.jit
def value_network_forward(state, w1, b1, w2, b2, wv, bv):
    """Fused fc1->relu->fc2->relu->v forward pass.

    state: (B, D) f32
    w1: (D, F1)  bf16/f32, b1: (1, F1) f32
    w2: (F1, F2) bf16/f32, b2: (1, F2) f32
    wv: (1, F2)  bf16/f32, bv: (1, 1)  f32
    returns: (B, 1) f32
    """
    B, D = state.shape
    F1 = w1.shape[1]
    F2 = w2.shape[1]

    grid, tile_b = _choose_tiling(B)
    Bp = grid * tile_b
    if Bp != B:
        state = jnp.pad(state, ((0, Bp - B), (0, 0)))   # padded rows dropped below

    const = lambda i: (0, 0)          # weights/biases: same block every step (resident)
    itemsize = lambda a: jnp.dtype(a.dtype).itemsize

    flops = 2 * Bp * (D * F1 + F1 * F2 + F2)
    bytes_accessed = int(
        Bp * D * 4 + Bp * 4
        + sum(a.size * itemsize(a) for a in (w1, b1, w2, b2, wv, bv)))

    out = pl.pallas_call(
        _value_kernel,
        out_shape=jax.ShapeDtypeStruct((grid, 1, tile_b), jnp.float32),
        grid=(grid,),
        in_specs=[
            pl.BlockSpec((tile_b, D), lambda i: (i, 0)),   # state tile (pipelined)
            pl.BlockSpec((D, F1), const),                  # w1 (resident)
            pl.BlockSpec((1, F1), const),                  # b1
            pl.BlockSpec((F1, F2), const),                 # w2 (resident)
            pl.BlockSpec((1, F2), const),                  # b2
            pl.BlockSpec((1, F2), const),                  # wv
            pl.BlockSpec((1, 1), const),                   # bv
        ],
        # lane-dense output row per batch tile
        out_specs=pl.BlockSpec((1, 1, tile_b), lambda i: (i, 0, 0)),
        compiler_params=pltpu.CompilerParams(
            dimension_semantics=("parallel",)),            # megacore split on v7x
        cost_estimate=pl.CostEstimate(
            flops=flops, transcendentals=0, bytes_accessed=bytes_accessed),
    )(state, w1, b1, w2, b2, wv, bv)

    # (grid, 1, tile_b) lane-dense rows -> flat padded batch order -> (B, 1)
    return out.reshape(Bp)[:B].reshape(B, 1)


def init_value_network_params(key, input_dim, fc1_dims=256, fc2_dims=256):
    """Deterministic init matching nn.Linear's U(-1/sqrt(fan_in), 1/sqrt(fan_in))."""
    ks = jax.random.split(key, 6)

    def uniform(k, shape, fan_in):
        bound = 1.0 / math.sqrt(fan_in)
        return jax.random.uniform(k, shape, jnp.float32, -bound, bound)

    # weights stored as (in, out); value head weight stored as a (1, F2) row
    w1 = uniform(ks[0], (input_dim, fc1_dims), input_dim)
    b1 = uniform(ks[1], (1, fc1_dims), input_dim)
    w2 = uniform(ks[2], (fc1_dims, fc2_dims), fc1_dims)
    b2 = uniform(ks[3], (1, fc2_dims), fc1_dims)
    wv = uniform(ks[4], (1, fc2_dims), fc2_dims)
    bv = uniform(ks[5], (1, 1), fc2_dims)
    return w1, b1, w2, b2, wv, bv


def _reference_forward(state, w1, b1, w2, b2, wv, bv):
    """Pure-JAX reference with matching bf16-activation / f32-accumulate numerics."""
    x = state.astype(jnp.bfloat16)
    h1 = jnp.maximum(jnp.dot(x, w1, preferred_element_type=jnp.float32) + b1, 0.0)
    h1 = h1.astype(jnp.bfloat16)
    h2 = jnp.maximum(jnp.dot(h1, w2, preferred_element_type=jnp.float32) + b2, 0.0)
    h2 = h2.astype(jnp.bfloat16)
    return jnp.dot(h2, wv.T, preferred_element_type=jnp.float32) + bv


# TODO(synk): Adam optimizer and checkpoint save/load from the PyTorch module are
# training/IO infrastructure and intentionally not part of this forward kernel.


if __name__ == "__main__":
    key = jax.random.PRNGKey(0)
    k_params, k_state = jax.random.split(key)

    batch = 300           # not a multiple of the tile -> exercises padding path
    input_dim = 8         # input_dims = (8,)
    fc1_dims = 256
    fc2_dims = 256

    w1, b1, w2, b2, wv, bv = init_value_network_params(
        k_params, input_dim, fc1_dims, fc2_dims)

    # Store weight matrices in bf16 (halves weight DMA / VMEM residency); the
    # kernel runs native bf16 MXU matmuls with f32 accumulation.
    w1_q = w1.astype(jnp.bfloat16)
    w2_q = w2.astype(jnp.bfloat16)
    wv_q = wv.astype(jnp.bfloat16)

    state = jax.random.normal(k_state, (batch, input_dim), jnp.float32)

    v = value_network_forward(state, w1_q, b1, w2_q, b2, wv_q, bv)
    v = jax.block_until_ready(v)

    v_ref = _reference_forward(state, w1_q, b1, w2_q, b2, wv_q, bv)

    assert v.shape == (batch, 1)
    assert jnp.allclose(v, v_ref, atol=2e-3, rtol=2e-3), "mismatch vs pure-JAX reference"

    print("KERNEL_OK")
</pallas_src>

<mosaic_0001>
module attributes {stable_mosaic.version = 11 : i64} {
  func.func @_value_kernel(%arg0: i32, %arg1: memref<152x8xf32, #tpu.memory_space<vmem>>, %arg2: memref<8x256xbf16, #tpu.memory_space<vmem>>, %arg3: memref<1x256xf32, #tpu.memory_space<vmem>>, %arg4: memref<256x256xbf16, #tpu.memory_space<vmem>>, %arg5: memref<1x256xf32, #tpu.memory_space<vmem>>, %arg6: memref<1x256xbf16, #tpu.memory_space<vmem>>, %arg7: memref<1x1xf32, #tpu.memory_space<vmem>>, %arg8: memref<1x1x152xf32, #tpu.memory_space<vmem>>) attributes {dimension_semantics = [#tpu.dimension_semantics<parallel>], iteration_bounds = array<i64: 2>, scalar_prefetch = 0 : i64, scratch_operands = 0 : i64, tpu.core_type = #tpu.core_type<tc>, window_params = [{transform_indices = @transform_0, window_bounds = array<i64: 152, 8>}, {pipeline_mode = #tpu.pipeline_mode<synchronous>, transform_indices = @transform_1, window_bounds = array<i64: 8, 256>}, {pipeline_mode = #tpu.pipeline_mode<synchronous>, transform_indices = @transform_2, window_bounds = array<i64: 1, 256>}, {pipeline_mode = #tpu.pipeline_mode<synchronous>, transform_indices = @transform_3, window_bounds = array<i64: 256, 256>}, {pipeline_mode = #tpu.pipeline_mode<synchronous>, transform_indices = @transform_4, window_bounds = array<i64: 1, 256>}, {pipeline_mode = #tpu.pipeline_mode<synchronous>, transform_indices = @transform_5, window_bounds = array<i64: 1, 256>}, {pipeline_mode = #tpu.pipeline_mode<synchronous>, transform_indices = @transform_6, window_bounds = array<i64: 1, 1>}, {transform_indices = @transform_7, window_bounds = array<i64: 1, 1, 152>}]} {
    %c0 = arith.constant 0 : index
    %c0_0 = arith.constant 0 : index
    %0 = vector.load %arg1[%c0, %c0_0] : memref<152x8xf32, #tpu.memory_space<vmem>>, vector<152x8xf32>
    %1 = arith.truncf %0 : vector<152x8xf32> to vector<152x8xbf16>
    %c0_1 = arith.constant 0 : index
    %c0_2 = arith.constant 0 : index
    %2 = vector.load %arg2[%c0_1, %c0_2] : memref<8x256xbf16, #tpu.memory_space<vmem>>, vector<8x256xbf16>
    %cst = arith.constant dense<0.000000e+00> : vector<152x256xf32>
    %3 = tpu.matmul %1, %2, %cst {dimension_numbers = #tpu.dot_dimension_numbers<[1], [0], [0], [1], [0, 0, 1, 1], [], []>} : vector<152x8xbf16>, vector<8x256xbf16>, vector<152x256xf32> -> vector<152x256xf32>
    %c0_3 = arith.constant 0 : index
    %c0_4 = arith.constant 0 : index
    %4 = vector.load %arg3[%c0_3, %c0_4] : memref<1x256xf32, #tpu.memory_space<vmem>>, vector<1x256xf32>
    %5 = vector.broadcast %4 : vector<1x256xf32> to vector<152x256xf32>
    %6 = arith.addf %3, %5 : vector<152x256xf32>
    %cst_5 = arith.constant 0.000000e+00 : f32
    %7 = vector.broadcast %cst_5 : f32 to vector<152x256xf32>
    %8 = arith.maximumf %6, %7 : vector<152x256xf32>
    %9 = arith.truncf %8 : vector<152x256xf32> to vector<152x256xbf16>
    %c0_6 = arith.constant 0 : index
    %c0_7 = arith.constant 0 : index
    %10 = vector.load %arg4[%c0_6, %c0_7] : memref<256x256xbf16, #tpu.memory_space<vmem>>, vector<256x256xbf16>
    %cst_8 = arith.constant dense<0.000000e+00> : vector<152x256xf32>
    %11 = tpu.matmul %9, %10, %cst_8 {dimension_numbers = #tpu.dot_dimension_numbers<[1], [0], [0], [1], [0, 0, 1, 1], [], []>} : vector<152x256xbf16>, vector<256x256xbf16>, vector<152x256xf32> -> vector<152x256xf32>
    %c0_9 = arith.constant 0 : index
    %c0_10 = arith.constant 0 : index
    %12 = vector.load %arg5[%c0_9, %c0_10] : memref<1x256xf32, #tpu.memory_space<vmem>>, vector<1x256xf32>
    %13 = vector.broadcast %12 : vector<1x256xf32> to vector<152x256xf32>
    %14 = arith.addf %11, %13 : vector<152x256xf32>
    %cst_11 = arith.constant 0.000000e+00 : f32
    %15 = vector.broadcast %cst_11 : f32 to vector<152x256xf32>
    %16 = arith.maximumf %14, %15 : vector<152x256xf32>
    %17 = arith.truncf %16 : vector<152x256xf32> to vector<152x256xbf16>
    %c0_12 = arith.constant 0 : index
    %c0_13 = arith.constant 0 : index
    %18 = vector.load %arg6[%c0_12, %c0_13] : memref<1x256xbf16, #tpu.memory_space<vmem>>, vector<1x256xbf16>
    %cst_14 = arith.constant dense<0.000000e+00> : vector<1x152xf32>
    %19 = tpu.matmul %18, %17, %cst_14 {dimension_numbers = #tpu.dot_dimension_numbers<[1], [1], [0], [0], [0, 0, 1, 0], [], []>} : vector<1x256xbf16>, vector<152x256xbf16>, vector<1x152xf32> -> vector<1x152xf32>
    %c0_15 = arith.constant 0 : index
    %c0_16 = arith.constant 0 : index
    %20 = vector.load %arg7[%c0_15, %c0_16] : memref<1x1xf32, #tpu.memory_space<vmem>>, vector<1x1xf32>
    %21 = vector.broadcast %20 : vector<1x1xf32> to vector<1x152xf32>
    %22 = arith.addf %19, %21 : vector<1x152xf32>
    %c0_17 = arith.constant 0 : index
    %c0_18 = arith.constant 0 : index
    %c0_19 = arith.constant 0 : index
    %23 = vector.load %arg8[%c0_17, %c0_18, %c0_19] : memref<1x1x152xf32, #tpu.memory_space<vmem>>, vector<1x1x152xf32>
    %24 = vector.shape_cast %23 : vector<1x1x152xf32> to vector<1x152xf32>
    %25 = vector.shape_cast %22 : vector<1x152xf32> to vector<1x1x152xf32>
    tpu.vector_store %arg8[%c0_17, %c0_18, %c0_19], %25 {strides = array<i32>} : memref<1x1x152xf32, #tpu.memory_space<vmem>>, vector<1x1x152xf32>,
    return
  }
  func.func @transform_0(%arg0: i32) -> (i32, i32) {
    %c0_i32 = arith.constant 0 : i32
    %c0_i32_0 = arith.constant 0 : i32
    return %arg0, %c0_i32 : i32, i32
  }
  func.func @transform_1(%arg0: i32) -> (i32, i32) {
    %c0_i32 = arith.constant 0 : i32
    %c0_i32_0 = arith.constant 0 : i32
    %c0_i32_1 = arith.constant 0 : i32
    return %c0_i32, %c0_i32_0 : i32, i32
  }
  func.func @transform_2(%arg0: i32) -> (i32, i32) {
    %c0_i32 = arith.constant 0 : i32
    %c0_i32_0 = arith.constant 0 : i32
    %c0_i32_1 = arith.constant 0 : i32
    return %c0_i32, %c0_i32_0 : i32, i32
  }
  func.func @transform_3(%arg0: i32) -> (i32, i32) {
    %c0_i32 = arith.constant 0 : i32
    %c0_i32_0 = arith.constant 0 : i32
    %c0_i32_1 = arith.constant 0 : i32
    return %c0_i32, %c0_i32_0 : i32, i32
  }
  func.func @transform_4(%arg0: i32) -> (i32, i32) {
    %c0_i32 = arith.constant 0 : i32
    %c0_i32_0 = arith.constant 0 : i32
    %c0_i32_1 = arith.constant 0 : i32
    return %c0_i32, %c0_i32_0 : i32, i32
  }
  func.func @transform_5(%arg0: i32) -> (i32, i32) {
    %c0_i32 = arith.constant 0 : i32
    %c0_i32_0 = arith.constant 0 : i32
    %c0_i32_1 = arith.constant 0 : i32
    return %c0_i32, %c0_i32_0 : i32, i32
  }
  func.func @transform_6(%arg0: i32) -> (i32, i32) {
    %c0_i32 = arith.constant 0 : i32
    %c0_i32_0 = arith.constant 0 : i32
    %c0_i32_1 = arith.constant 0 : i32
    return %c0_i32, %c0_i32_0 : i32, i32
  }
  func.func @transform_7(%arg0: i32) -> (i32, i32, i32) {
    %c0_i32 = arith.constant 0 : i32
    %c0_i32_0 = arith.constant 0 : i32
    %c0_i32_1 = arith.constant 0 : i32
    return %arg0, %c0_i32, %c0_i32_0 : i32, i32, i32
  }
}

</mosaic_0001>

<llo_original>
// kernel: value_network_forward.1
$region0: #{value_network_forward.1}
  #allocation0 [shape = 'u32[]', space=smem, size = 0x4, offset = 0x4, fixed_abs, tag = 'smem constant byte address 0x4 - core index']
  #allocation1 [shape = 'u32[144,128]{1,0:T(1,128)}', space=vmem, size = 0x12000, scoped, tag = 'internal scratch']
  #allocation2 [shape = 'f32[1,1]{1,0:T(1,128)S(1)}', space=vmem, size = 0x200, scoped, tag = 'scoped memory for value_network_forward.1']
  %s0 = inlined_call_operand.vmem [shape: f32[304,8], index: 0, kind: input, shape index: {}]
  %s1 = inlined_call_operand.vmem [shape: bf16[8,256], index: 1, kind: input, shape index: {}]
  %s2 = inlined_call_operand.vmem [shape: f32[1,256], index: 2, kind: input, shape index: {}]
  %s3 = inlined_call_operand.vmem [shape: bf16[256,256], index: 3, kind: input, shape index: {}]
  %s4 = inlined_call_operand.vmem [shape: f32[1,256], index: 4, kind: input, shape index: {}]
  %s5 = inlined_call_operand.vmem [shape: bf16[1,256], index: 5, kind: input, shape index: {}]
  %s6 = inlined_call_operand.<no memory space> [shape: f32[1,1], index: 6, kind: input, shape index: {}]
  %s7 = inlined_call_operand.vmem [shape: f32[2,1,152], index: 7, kind: output, shape index: {}]
  %s8 = sld [smem:[#allocation0]]
  $region61: #{value_network_forward.1} parent=0
    _
  %s10 = ssub.s32 1, %s8
  %s11 = scalar_select 0, %s10, %s8
  %v12 = vstv %s6
  %13 = vst [vmem:[#allocation2] sm:$0x1] %v12
  loop: start=0, step=1, limit=4
  $region2: #{value_network_forward.1} parent=0 // loop_pre_header
    _
  $region3: #{value_network_forward.1} parent=0 // loop_header
    %s15 = sphi 0, %s19
    %p16 = scmp.ge.s32.totalorder %s15, 4
    %s25 = sphi 0, %s27
    %s28 = sphi 0, %s25
    %s29 = sphi 0, %s28
    %s45 = sphi 0, %s29
    %s49 = sphi 0, %s49
    %s51 = sphi 0, %s49
    %s52 = sphi 0, %s51
    %s66 = sphi 0, %s52
    %s70 = sphi 0, %s70
    %s72 = sphi 0, %s70
    %s73 = sphi 0, %s72
    %s87 = sphi 0, %s73
    %s91 = sphi 0, %s91
    %s93 = sphi 0, %s91
    %s94 = sphi 0, %s93
    %s108 = sphi 0, %s94
    %s112 = sphi 0, %s112
    %s114 = sphi 0, %s112
    %s115 = sphi 0, %s114
    %s129 = sphi 0, %s115
    %s133 = sphi 0, %s133
    %s135 = sphi 0, %s133
    %s136 = sphi 0, %s135
    %s150 = sphi 0, %s136
    %s154 = sphi 0, %s154
    %s156 = sphi 0, %s154
    %s157 = sphi 0, %s156
    %s171 = sphi 0, %s157
    %s177 = sphi 0, %s179
    %s180 = sphi 0, %s177
    %s181 = sphi 0, %s180
    %s197 = sphi 0, %s181
  $region4: #{value_network_forward.1} parent=0 // loop_header_branch
    %18 = sbr.rel (%p16) target = $region8
  $region5: #{value_network_forward.1} parent=0 // loop_body
    %s20 = ssub.s32 %s15, 1
    %s21 = ssub.s32 %s15, 2
    %s22 = sadd.s32 %s15, 1
    %s23 = ssub.s32 %s15, %s22
    %p24 = scmp.eq.s32.totalorder %s23, 0
    %s26 = sadd.s32 %s25, 1
    %s27 = scalar_select %p24, %s25, %s26
    %p30 = pneg %p24
    %p31 = scmp.eq.s32.totalorder %s15, 1
    %p32 = por %p30, %p31
    %p33 = scmp.ne.s32.totalorder %s25, %s28
    %p34 = scmp.eq.s32.totalorder %s15, 0
    %p35 = por %p33, %p34
    %p36 = scmp.ne.s32.totalorder %s25, %s28
    %p37 = scmp.eq.s32.totalorder %s20, 1
    %p38 = por %p36, %p37
    %p39 = scmp.ne.s32.totalorder %s28, %s29
    %p40 = scmp.eq.s32.totalorder %s20, 0
    %p41 = por %p39, %p40
    %p42 = scmp.ne.s32.totalorder %s28, %s29
    %p43 = scmp.eq.s32.totalorder %s21, 1
    %p44 = por %p42, %p43
    %p46 = scmp.ne.s32.totalorder %s29, %s45
    %p47 = scmp.eq.s32.totalorder %s21, 0
    %p48 = por %p46, %p47
    %s50 = sadd.s32 %s49, 1
    %p53 = scmp.eq.s32.totalorder %s15, 1
    %p54 = scmp.ne.s32.totalorder %s49, %s51
    %p55 = scmp.eq.s32.totalorder %s15, 0
    %p56 = por %p54, %p55
    %p57 = scmp.ne.s32.totalorder %s49, %s51
    %p58 = scmp.eq.s32.totalorder %s20, 1
    %p59 = por %p57, %p58
    %p60 = scmp.ne.s32.totalorder %s51, %s52
    %p61 = scmp.eq.s32.totalorder %s20, 0
    %p62 = por %p60, %p61
    %p63 = scmp.ne.s32.totalorder %s51, %s52
    %p64 = scmp.eq.s32.totalorder %s21, 1
    %p65 = por %p63, %p64
    %p67 = scmp.ne.s32.totalorder %s52, %s66
    %p68 = scmp.eq.s32.totalorder %s21, 0
    %p69 = por %p67, %p68
    %s71 = sadd.s32 %s70, 1
    %p74 = scmp.eq.s32.totalorder %s15, 1
    %p75 = scmp.ne.s32.totalorder %s70, %s72
    %p76 = scmp.eq.s32.totalorder %s15, 0
    %p77 = por %p75, %p76
    %p78 = scmp.ne.s32.totalorder %s70, %s72
    %p79 = scmp.eq.s32.totalorder %s20, 1
    %p80 = por %p78, %p79
    %p81 = scmp.ne.s32.totalorder %s72, %s73
    %p82 = scmp.eq.s32.totalorder %s20, 0
    %p83 = por %p81, %p82
    %p84 = scmp.ne.s32.totalorder %s72, %s73
    %p85 = scmp.eq.s32.totalorder %s21, 1
    %p86 = por %p84, %p85
    %p88 = scmp.ne.s32.totalorder %s73, %s87
    %p89 = scmp.eq.s32.totalorder %s21, 0
    %p90 = por %p88, %p89
    %s92 = sadd.s32 %s91, 1
    %p95 = scmp.eq.s32.totalorder %s15, 1
    %p96 = scmp.ne.s32.totalorder %s91, %s93
    %p97 = scmp.eq.s32.totalorder %s15, 0
    %p98 = por %p96, %p97
    %p99 = scmp.ne.s32.totalorder %s91, %s93
    %p100 = scmp.eq.s32.totalorder %s20, 1
    %p101 = por %p99, %p100
    %p102 = scmp.ne.s32.totalorder %s93, %s94
    %p103 = scmp.eq.s32.totalorder %s20, 0
    %p104 = por %p102, %p103
    %p105 = scmp.ne.s32.totalorder %s93, %s94
    %p106 = scmp.eq.s32.totalorder %s21, 1
    %p107 = por %p105, %p106
    %p109 = scmp.ne.s32.totalorder %s94, %s108
    %p110 = scmp.eq.s32.totalorder %s21, 0
    %p111 = por %p109, %p110
    %s113 = sadd.s32 %s112, 1
    %p116 = scmp.eq.s32.totalorder %s15, 1
    %p117 = scmp.ne.s32.totalorder %s112, %s114
    %p118 = scmp.eq.s32.totalorder %s15, 0
    %p119 = por %p117, %p118
    %p120 = scmp.ne.s32.totalorder %s112, %s114
    %p121 = scmp.eq.s32.totalorder %s20, 1
    %p122 = por %p120, %p121
    %p123 = scmp.ne.s32.totalorder %s114, %s115
    %p124 = scmp.eq.s32.totalorder %s20, 0
    %p125 = por %p123, %p124
    %p126 = scmp.ne.s32.totalorder %s114, %s115
    %p127 = scmp.eq.s32.totalorder %s21, 1
    %p128 = por %p126, %p127
    %p130 = scmp.ne.s32.totalorder %s115, %s129
    %p131 = scmp.eq.s32.totalorder %s21, 0
    %p132 = por %p130, %p131
    %s134 = sadd.s32 %s133, 1
    %p137 = scmp.eq.s32.totalorder %s15, 1
    %p138 = scmp.ne.s32.totalorder %s133, %s135
    %p139 = scmp.eq.s32.totalorder %s15, 0
    %p140 = por %p138, %p139
    %p141 = scmp.ne.s32.totalorder %s133, %s135
    %p142 = scmp.eq.s32.totalorder %s20, 1
    %p143 = por %p141, %p142
    %p144 = scmp.ne.s32.totalorder %s135, %s136
    %p145 = scmp.eq.s32.totalorder %s20, 0
    %p146 = por %p144, %p145
    %p147 = scmp.ne.s32.totalorder %s135, %s136
    %p148 = scmp.eq.s32.totalorder %s21, 1
    %p149 = por %p147, %p148
    %p151 = scmp.ne.s32.totalorder %s136, %s150
    %p152 = scmp.eq.s32.totalorder %s21, 0
    %p153 = por %p151, %p152
    %s155 = sadd.s32 %s154, 1
    %p158 = scmp.eq.s32.totalorder %s15, 1
    %p159 = scmp.ne.s32.totalorder %s154, %s156
    %p160 = scmp.eq.s32.totalorder %s15, 0
    %p161 = por %p159, %p160
    %p162 = scmp.ne.s32.totalorder %s154, %s156
    %p163 = scmp.eq.s32.totalorder %s20, 1
    %p164 = por %p162, %p163
    %p165 = scmp.ne.s32.totalorder %s156, %s157
    %p166 = scmp.eq.s32.totalorder %s20, 0
    %p167 = por %p165, %p166
    %p168 = scmp.ne.s32.totalorder %s156, %s157
    %p169 = scmp.eq.s32.totalorder %s21, 1
    %p170 = por %p168, %p169
    %p172 = scmp.ne.s32.totalorder %s157, %s171
    %p173 = scmp.eq.s32.totalorder %s21, 0
    %p174 = por %p172, %p173
    %s175 = ssub.s32 %s15, %s22
    %p176 = scmp.eq.s32.totalorder %s175, 0
    %s178 = sadd.s32 %s177, 1
    %s179 = scalar_select %p176, %s177, %s178
    %p182 = pneg %p176
    %p183 = scmp.eq.s32.totalorder %s15, 1
    %p184 = por %p182, %p183
    %p185 = scmp.ne.s32.totalorder %s177, %s180
    %p186 = scmp.eq.s32.totalorder %s15, 0
    %p187 = por %p185, %p186
    %p188 = scmp.ne.s32.totalorder %s177, %s180
    %p189 = scmp.eq.s32.totalorder %s20, 1
    %p190 = por %p188, %p189
    %p191 = scmp.ne.s32.totalorder %s180, %s181
    %p192 = scmp.eq.s32.totalorder %s20, 0
    %p193 = por %p191, %p192
    %p194 = scmp.ne.s32.totalorder %s180, %s181
    %p195 = scmp.eq.s32.totalorder %s21, 1
    %p196 = por %p194, %p195
    %p198 = scmp.ne.s32.totalorder %s181, %s197
    %p199 = scmp.eq.s32.totalorder %s21, 0
    %p200 = por %p198, %p199
    %p201 = scmp.le.s32.totalorder 1, %s15
    %p202 = scmp.lt.s32.totalorder %s15, 3
    %p203 = pnand %p201, %p202
    %p204 = pneg %p203
    // Predicated region
    $region9: #{value_network_forward.1} parent=5 // pred_check
      _
    $region10: #{value_network_forward.1} parent=5 // pred_check_branch
      %206 = sbr.rel (%p203) target = $region12
    $region11: #{value_network_forward.1} parent=5 // pred_region
      %s207 = ssub.s32 %s15, 1
      // Predicated region
      $region13: #{value_network_forward.1} parent=11 // pred_check
        %p208 = pneg %p62
      $region14: #{value_network_forward.1} parent=11 // pred_check_branch
        %210 = sbr.rel (%p208) target = $region16
      $region15: #{value_network_forward.1} parent=11 // pred_region
        _
      $region16: #{value_network_forward.1} parent=11 // pred_fallthru
        _
      // Predicated region
      $region17: #{value_network_forward.1} parent=11 // pred_check
        %p211 = pneg %p83
      $region18: #{value_network_forward.1} parent=11 // pred_check_branch
        %213 = sbr.rel (%p211) target = $region20
      $region19: #{value_network_forward.1} parent=11 // pred_region
        _
      $region20: #{value_network_forward.1} parent=11 // pred_fallthru
        _
      // Predicated region
      $region21: #{value_network_forward.1} parent=11 // pred_check
        %p214 = pneg %p104
      $region22: #{value_network_forward.1} parent=11 // pred_check_branch
        %216 = sbr.rel (%p214) target = $region24
      $region23: #{value_network_forward.1} parent=11 // pred_region
        _
      $region24: #{value_network_forward.1} parent=11 // pred_fallthru
        _
      // Predicated region
      $region25: #{value_network_forward.1} parent=11 // pred_check
        %p217 = pneg %p125
      $region26: #{value_network_forward.1} parent=11 // pred_check_branch
        %219 = sbr.rel (%p217) target = $region28
      $region27: #{value_network_forward.1} parent=11 // pred_region
        _
      $region28: #{value_network_forward.1} parent=11 // pred_fallthru
        _
      // Predicated region
      $region29: #{value_network_forward.1} parent=11 // pred_check
        %p220 = pneg %p146
      $region30: #{value_network_forward.1} parent=11 // pred_check_branch
        %222 = sbr.rel (%p220) target = $region32
      $region31: #{value_network_forward.1} parent=11 // pred_region
        _
      $region32: #{value_network_forward.1} parent=11 // pred_fallthru
        _
      // Predicated region
      $region33: #{value_network_forward.1} parent=11 // pred_check
        %p223 = pneg %p167
      $region34: #{value_network_forward.1} parent=11 // pred_check_branch
        %225 = sbr.rel (%p223) target = $region36
      $region35: #{value_network_forward.1} parent=11 // pred_region
        _
      $region36: #{value_network_forward.1} parent=11 // pred_fallthru
        _
    $region12: #{value_network_forward.1} parent=5 // pred_fallthru
      _
    %p226 = scmp.lt.s32.totalorder %s15, 2
    // Predicated region
    $region37: #{value_network_forward.1} parent=5 // pred_check
      %p227 = pneg %p226
    $region38: #{value_network_forward.1} parent=5 // pred_check_branch
      %229 = sbr.rel (%p227) target = $region40
    $region39: #{value_network_forward.1} parent=5 // pred_region
      // Predicated region
      $region41: #{value_network_forward.1} parent=39 // pred_check
        %p230 = pneg %p35
      $region42: #{value_network_forward.1} parent=39 // pred_check_branch
        %232 = sbr.rel (%p230) target = $region44
      $region43: #{value_network_forward.1} parent=39 // pred_region
        %s233 = smul.u32 19, %s15
        %p234 = scmp.lt.s32.totalorder %s233, 37
        %s235 = scalar_select %p234, %s233, 37
        %s236 = smul.addr %s235, 8
        %s237 = scalar_lea.vmem %s0, %s236
        %s238 = smul.u32 19, %s15
      $region44: #{value_network_forward.1} parent=39 // pred_fallthru
        _
    $region40: #{value_network_forward.1} parent=5 // pred_fallthru
      _
    %p239 = scmp.le.s32.totalorder 1, %s15
    %p240 = scmp.lt.s32.totalorder %s15, 3
    %p241 = pnand %p239, %p240
    %p242 = pneg %p241
    // Predicated region
    $region45: #{value_network_forward.1} parent=5 // pred_check
      _
    $region46: #{value_network_forward.1} parent=5 // pred_check_branch
      %244 = sbr.rel (%p241) target = $region48
    $region47: #{value_network_forward.1} parent=5 // pred_region
      %s245 = ssub.s32 %s15, 1
      %s246 = smul.u32 19, %s20
      %p247 = scmp.lt.s32.totalorder %s246, 37
      %s248 = scalar_select %p247, %s246, 37
      %s249 = smul.addr %s248, 8
      %s250 = scalar_lea.vmem %s0, %s249
      %p251 = pneg %p41
      %p252 = pneg %p38
      %p253 = pneg %p62
      %p254 = pneg %p59
      %p255 = pneg %p83
      %p256 = pneg %p80
      %p257 = pneg %p104
      %p258 = pneg %p101
      %p259 = pneg %p125
      %p260 = pneg %p122
      %p261 = pneg %p146
      %p262 = pneg %p143
      %p263 = pneg %p167
      %p264 = pneg %p164
      %p265 = pneg %p193
      %p266 = pneg %p190
      %p267 = scmp.lt.s32.totalorder %s20, 1
      %s268 = scalar_select %p267, %s20, 1
      %s269 = smul.addr %s268, 2
      %s270 = scalar_lea.vmem %s7, %s269
      %s271 = smul.u32 19, %s20
      %p272 = scmp.lt.s32.totalorder %s271, 37
      %s273 = scalar_select %p272, %s271, 37
      %s274 = smul.addr %s273, 8
      %s275 = scalar_lea.vmem %s0, %s274
      %s276 = smul.u32 19, %s20
      %p277 = scmp.lt.s32.totalorder %s20, 1
      %s278 = scalar_select %p277, %s20, 1
      %s279 = smul.addr %s278, 2
      %s280 = scalar_lea.vmem %s7, %s279
      %v282 = vld [vmem:[%s275] sm:$0xff]
      %v283 = vld [vmem:[%s275 + $0x8] sm:$0xff]
      %v284 = vld [vmem:[%s275 + $0x10] sm:$0xff]
      %v285 = vld [vmem:[%s275 + $0x18] sm:$0xff]
      %v286 = vld [vmem:[%s275 + $0x20] sm:$0xff]
      %v287 = vld [vmem:[%s275 + $0x28] sm:$0xff]
      %v288 = vld [vmem:[%s275 + $0x30] sm:$0xff]
      %v289 = vld [vmem:[%s275 + $0x38] sm:$0xff]
      %v290 = vld [vmem:[%s275 + $0x40] sm:$0xff]
      %v291 = vld [vmem:[%s275 + $0x48] sm:$0xff]
      %v292 = vld [vmem:[%s275 + $0x50] sm:$0xff]
      %v293 = vld [vmem:[%s275 + $0x58] sm:$0xff]
      %v294 = vld [vmem:[%s275 + $0x60] sm:$0xff]
      %v295 = vld [vmem:[%s275 + $0x68] sm:$0xff]
      %v296 = vld [vmem:[%s275 + $0x70] sm:$0xff]
      %v297 = vld [vmem:[%s275 + $0x78] sm:$0xff]
      %v298 = vld [vmem:[%s275 + $0x80] sm:$0xff]
      %v299 = vld [vmem:[%s275 + $0x88] sm:$0xff]
      %v300 = vld [vmem:[%s275 + $0x90] sm:$0xff]
      %v301 = vpack.c.bf16 %v283, %v282
      %v302 = vpack.c.bf16 %v285, %v284
      %v303 = vpack.c.bf16 %v287, %v286
      %v304 = vpack.c.bf16 %v289, %v288
      %v305 = vpack.c.bf16 %v291, %v290
      %v306 = vpack.c.bf16 %v293, %v292
      %v307 = vpack.c.bf16 %v295, %v294
      %v308 = vpack.c.bf16 %v297, %v296
      %v309 = vpack.c.bf16 %v299, %v298
      %v310 = vpack.c.bf16 %v300, %v300
      %v311 = vld [vmem:[%s1] sm:$0xff]
      %v312 = vld [vmem:[%s2] sm:$0x3]
      %v314 = vlaneseq
      %v315 = vshrl.u32 %v314, 7
      %v316 = vsub.s32 0, %v315
      %v317 = vrot.slane %v312, %v316
      %v318 = vlaneseq
      %v319 = vshrl.u32 %v318, 7
      %v320 = vsub.s32 1, %v319
      %v321 = vrot.slane %v312, %v320
      %v325 = vunpack.c.l.b16 %v311
      %v326 = vunpack.c.h.b16 %v311
      %v327 = vpack.c.b16 %v325, %v325
      %v328 = vpack.c.b16 %v326, %v326
      %vm329 = vcmask 64512
      %v331 = vsel %vm329, %v301, 0
      %v334 = vsel %vm329, %v302, 0
      %v337 = vsel %vm329, %v303, 0
      %v340 = vsel %vm329, %v304, 0
      %v343 = vsel %vm329, %v305, 0
      %v346 = vsel %vm329, %v306, 0
      %v349 = vsel %vm329, %v307, 0
      %v352 = vsel %vm329, %v308, 0
      %v355 = vsel %vm329, %v309, 0
      %v358 = vsel %vm329, %v310, 0
      %vm360 = vcmask 1043456
      %v362 = vsel %vm360, %v327, 0
      %v365 = vsel %vm360, %v328, 0
      %367 = vmatprep.subr.bf16.mxu0 0
      %368 = vmatpush1.bf16.msra.mxu0 0
      %369 = vmatprep.subr.bf16.mxu0 0
      %370 = vmatpush1.bf16.msra.mxu0 0
      %371 = vmatprep.subr.bf16.mxu0 0
      %372 = vmatpush1.bf16.msra.mxu0 0
      %373 = vmatprep.subr.bf16.mxu0 0
      %374 = vmatpush1.bf16.msra.mxu0 0
      %375 = vmatprep.subr.bf16.mxu0 0
      %376 = vmatpush1.bf16.msra.mxu0 0
      %377 = vmatprep.subr.bf16.mxu0 0
      %378 = vmatpush1.bf16.msra.mxu0 0
      %379 = vmatprep.subr.bf16.mxu0 0
      %380 = vmatpush1.bf16.msra.mxu0 0
      %381 = vmatprep.subr.bf16.mxu0 %v365
      %382 = vmatpush1.bf16.msra.mxu0 %v362
      %383 = vmatprep.subr.bf16.mxu0 0
      %384 = vmatpush2.bf16.msra.mxu0 0
      %385 = vmatprep.subr.bf16.mxu0 0
      %386 = vmatpush2.bf16.msra.mxu0 0
      %387 = vmatprep.subr.bf16.mxu0 0
      %388 = vmatpush2.bf16.msra.mxu0 0
      %389 = vmatprep.subr.bf16.mxu0 0
      %390 = vmatpush2.bf16.msra.mxu0 0
      %391 = vmatprep.subr.bf16.mxu0 0
      %392 = vmatpush2.bf16.msra.mxu0 0
      %393 = vmatprep.subr.bf16.mxu0 0
      %394 = vmatpush2.bf16.msra.mxu0 0
      %395 = vmatprep.subr.bf16.mxu0 0
      %396 = vmatpush2.bf16.msra.mxu0 0
      %397 = vmatprep.subr.bf16.mxu0 0
      %398 = vmatpush2.bf16.msra.mxu0 0
      %399 = vmatprep.mubr.bf16.mxu0 0
      %400 = vmatmul.mubr.bf16.gmra.mxu0 %v331
      %v401 = vpop.f32.mrf.mxu0
      %v402 = vadd.f32 %v317, %v401
      %v403 = vpop.f32.mrf.mxu0
      %v404 = vadd.f32 %v321, %v403
      %v405 = vpop.f32.mrf.mxu0
      %v406 = vadd.f32 %v317, %v405
      %v407 = vpop.f32.mrf.mxu0
      %v408 = vadd.f32 %v321, %v407
      %409 = vmatprep.mubr.bf16.mxu0 0
      %410 = vmatmul.mubr.bf16.gmra.mxu0 %v334
      %v411 = vpop.f32.mrf.mxu0
      %v412 = vadd.f32 %v317, %v411
      %v413 = vpop.f32.mrf.mxu0
      %v414 = vadd.f32 %v321, %v413
      %v415 = vpop.f32.mrf.mxu0
      %v416 = vadd.f32 %v317, %v415
      %v417 = vpop.f32.mrf.mxu0
      %v418 = vadd.f32 %v321, %v417
      %419 = vmatprep.mubr.bf16.mxu0 0
      %420 = vmatmul.mubr.bf16.gmra.mxu0 %v337
      %v421 = vpop.f32.mrf.mxu0
      %v422 = vadd.f32 %v317, %v421
      %v423 = vpop.f32.mrf.mxu0
      %v424 = vadd.f32 %v321, %v423
      %v425 = vpop.f32.mrf.mxu0
      %v426 = vadd.f32 %v317, %v425
      %v427 = vpop.f32.mrf.mxu0
      %v428 = vadd.f32 %v321, %v427
      %429 = vmatprep.mubr.bf16.mxu0 0
      %430 = vmatmul.mubr.bf16.gmra.mxu0 %v340
      %v431 = vpop.f32.mrf.mxu0
      %v432 = vadd.f32 %v317, %v431
      %v433 = vpop.f32.mrf.mxu0
      %v434 = vadd.f32 %v321, %v433
      %v435 = vpop.f32.mrf.mxu0
      %v436 = vadd.f32 %v317, %v435
      %v437 = vpop.f32.mrf.mxu0
      %v438 = vadd.f32 %v321, %v437
      %439 = vmatprep.mubr.bf16.mxu0 0
      %440 = vmatmul.mubr.bf16.gmra.mxu0 %v343
      %v441 = vpop.f32.mrf.mxu0
      %v442 = vadd.f32 %v317, %v441
      %v443 = vpop.f32.mrf.mxu0
      %v444 = vadd.f32 %v321, %v443
      %v445 = vpop.f32.mrf.mxu0
      %v446 = vadd.f32 %v317, %v445
      %v447 = vpop.f32.mrf.mxu0
      %v448 = vadd.f32 %v321, %v447
      %449 = vmatprep.mubr.bf16.mxu0 0
      %450 = vmatmul.mubr.bf16.gmra.mxu0 %v346
      %v451 = vpop.f32.mrf.mxu0
      %v452 = vadd.f32 %v317, %v451
      %v453 = vpop.f32.mrf.mxu0
      %v454 = vadd.f32 %v321, %v453
      %v455 = vpop.f32.mrf.mxu0
      %v456 = vadd.f32 %v317, %v455
      %v457 = vpop.f32.mrf.mxu0
      %v458 = vadd.f32 %v321, %v457
      %459 = vmatprep.mubr.bf16.mxu0 0
      %460 = vmatmul.mubr.bf16.gmra.mxu0 %v349
      %v461 = vpop.f32.mrf.mxu0
      %v462 = vadd.f32 %v317, %v461
      %v463 = vpop.f32.mrf.mxu0
      %v464 = vadd.f32 %v321, %v463
      %v465 = vpop.f32.mrf.mxu0
      %v466 = vadd.f32 %v317, %v465
      %v467 = vpop.f32.mrf.mxu0
      %v468 = vadd.f32 %v321, %v467
      %469 = vmatprep.mubr.bf16.mxu0 0
      %470 = vmatmul.mubr.bf16.gmra.mxu0 %v352
      %v471 = vpop.f32.mrf.mxu0
      %v472 = vadd.f32 %v317, %v471
      %v473 = vpop.f32.mrf.mxu0
      %v474 = vadd.f32 %v321, %v473
      %v475 = vpop.f32.mrf.mxu0
      %v476 = vadd.f32 %v317, %v475
      %v477 = vpop.f32.mrf.mxu0
      %v478 = vadd.f32 %v321, %v477
      %479 = vmatprep.mubr.bf16.mxu0 0
      %480 = vmatmul.mubr.bf16.gmra.mxu0 %v355
      %v481 = vpop.f32.mrf.mxu0
      %v482 = vadd.f32 %v317, %v481
      %v483 = vpop.f32.mrf.mxu0
      %v484 = vadd.f32 %v321, %v483
      %v485 = vpop.f32.mrf.mxu0
      %v486 = vadd.f32 %v317, %v485
      %v487 = vpop.f32.mrf.mxu0
      %v488 = vadd.f32 %v321, %v487
      %489 = vmatprep.mubr.bf16.mxu0 0
      %490 = vmatmul.mubr.bf16.gmra.mxu0 %v358
      %v491 = vpop.f32.mrf.mxu0
      %v492 = vadd.f32 %v317, %v491
      %v493 = vpop.f32.mrf.mxu0
      %v494 = vadd.f32 %v321, %v493
      %v495 = vpop.f32.mrf.mxu0
      %v496 = vpop.f32.mrf.mxu0
      %497 = vdwg.mxu0
      %v498 = vmax.f32 %v402, 0.0
      %v499 = vmax.f32 %v404, 0.0
      %v500 = vmax.f32 %v406, 0.0
      %v501 = vmax.f32 %v408, 0.0
      %v502 = vmax.f32 %v412, 0.0
      %v503 = vmax.f32 %v414, 0.0
      %v504 = vmax.f32 %v416, 0.0
      %v505 = vmax.f32 %v418, 0.0
      %v506 = vmax.f32 %v422, 0.0
      %v507 = vmax.f32 %v424, 0.0
      %v508 = vmax.f32 %v426, 0.0
      %v509 = vmax.f32 %v428, 0.0
      %v510 = vmax.f32 %v432, 0.0
      %v511 = vmax.f32 %v434, 0.0
      %v512 = vmax.f32 %v436, 0.0
      %v513 = vmax.f32 %v438, 0.0
      %v514 = vmax.f32 %v442, 0.0
      %v515 = vmax.f32 %v444, 0.0
      %v516 = vmax.f32 %v446, 0.0
      %v517 = vmax.f32 %v448, 0.0
      %v518 = vmax.f32 %v452, 0.0
      %v519 = vmax.f32 %v454, 0.0
      %v520 = vmax.f32 %v456, 0.0
      %v521 = vmax.f32 %v458, 0.0
      %v522 = vmax.f32 %v462, 0.0
      %v523 = vmax.f32 %v464, 0.0
      %v524 = vmax.f32 %v466, 0.0
      %v525 = vmax.f32 %v468, 0.0
      %v526 = vmax.f32 %v472, 0.0
      %v527 = vmax.f32 %v474, 0.0
      %v528 = vmax.f32 %v476, 0.0
      %v529 = vmax.f32 %v478, 0.0
      %v530 = vmax.f32 %v482, 0.0
      %v531 = vmax.f32 %v484, 0.0
      %v532 = vmax.f32 %v486, 0.0
      %v533 = vmax.f32 %v488, 0.0
      %v534 = vmax.f32 %v492, 0.0
      %v535 = vmax.f32 %v494, 0.0
      %v536 = vpack.c.bf16 %v500, %v498
      %v537 = vpack.c.bf16 %v501, %v499
      %v538 = vpack.c.bf16 %v504, %v502
      %v539 = vpack.c.bf16 %v505, %v503
      %v540 = vpack.c.bf16 %v508, %v506
      %v541 = vpack.c.bf16 %v509, %v507
      %v542 = vpack.c.bf16 %v512, %v510
      %v543 = vpack.c.bf16 %v513, %v511
      %v544 = vpack.c.bf16 %v516, %v514
      %v545 = vpack.c.bf16 %v517, %v515
      %v546 = vpack.c.bf16 %v520, %v518
      %v547 = vpack.c.bf16 %v521, %v519
      %v548 = vpack.c.bf16 %v524, %v522
      %v549 = vpack.c.bf16 %v525, %v523
      %v550 = vpack.c.bf16 %v528, %v526
      %v551 = vpack.c.bf16 %v529, %v527
      %v552 = vpack.c.bf16 %v532, %v530
      %v553 = vpack.c.bf16 %v533, %v531
      %v554 = vpack.c.bf16 %v534, %v534
      %v555 = vpack.c.bf16 %v535, %v535
      %v556 = vld [vmem:[%s3] sm:$0xff]
      %v557 = vld [vmem:[%s3 + $0x8] sm:$0xff]
      %v558 = vld [vmem:[%s3 + $0x10] sm:$0xff]
      %v559 = vld [vmem:[%s3 + $0x18] sm:$0xff]
      %v560 = vld [vmem:[%s3 + $0x20] sm:$0xff]
      %v561 = vld [vmem:[%s3 + $0x28] sm:$0xff]
      %v562 = vld [vmem:[%s3 + $0x30] sm:$0xff]
      %v563 = vld [vmem:[%s3 + $0x38] sm:$0xff]
      %v564 = vld [vmem:[%s3 + $0x40] sm:$0xff]
      %v565 = vld [vmem:[%s3 + $0x48] sm:$0xff]
      %v566 = vld [vmem:[%s3 + $0x50] sm:$0xff]
      %v567 = vld [vmem:[%s3 + $0x58] sm:$0xff]
      %v568 = vld [vmem:[%s3 + $0x60] sm:$0xff]
      %v569 = vld [vmem:[%s3 + $0x68] sm:$0xff]
      %v570 = vld [vmem:[%s3 + $0x70] sm:$0xff]
      %v571 = vld [vmem:[%s3 + $0x78] sm:$0xff]
      %v572 = vld [vmem:[%s3 + $0x80] sm:$0xff]
      %v573 = vld [vmem:[%s3 + $0x88] sm:$0xff]
      %v574 = vld [vmem:[%s3 + $0x90] sm:$0xff]
      %v575 = vld [vmem:[%s3 + $0x98] sm:$0xff]
      %v576 = vld [vmem:[%s3 + $0xa0] sm:$0xff]
      %v577 = vld [vmem:[%s3 + $0xa8] sm:$0xff]
      %v578 = vld [vmem:[%s3 + $0xb0] sm:$0xff]
      %v579 = vld [vmem:[%s3 + $0xb8] sm:$0xff]
      %v580 = vld [vmem:[%s3 + $0xc0] sm:$0xff]
      %v581 = vld [vmem:[%s3 + $0xc8] sm:$0xff]
      %v582 = vld [vmem:[%s3 + $0xd0] sm:$0xff]
      %v583 = vld [vmem:[%s3 + $0xd8] sm:$0xff]
      %v584 = vld [vmem:[%s3 + $0xe0] sm:$0xff]
      %v585 = vld [vmem:[%s3 + $0xe8] sm:$0xff]
      %v586 = vld [vmem:[%s3 + $0xf0] sm:$0xff]
      %v587 = vld [vmem:[%s3 + $0xf8] sm:$0xff]
      %v588 = vld [vmem:[%s4] sm:$0x3]
      %v590 = vlaneseq
      %v591 = vshrl.u32 %v590, 7
      %v592 = vsub.s32 0, %v591
      %v593 = vrot.slane %v588, %v592
      %v594 = vlaneseq
      %v595 = vshrl.u32 %v594, 7
      %v596 = vsub.s32 1, %v595
      %v597 = vrot.slane %v588, %v596
      %v632 = vunpack.c.l.b16 %v556
      %v633 = vunpack.c.h.b16 %v556
      %v634 = vunpack.c.l.b16 %v557
      %v635 = vunpack.c.h.b16 %v557
      %v636 = vunpack.c.l.b16 %v558
      %v637 = vunpack.c.h.b16 %v558
      %v638 = vunpack.c.l.b16 %v559
      %v639 = vunpack.c.h.b16 %v559
      %v640 = vunpack.c.l.b16 %v560
      %v641 = vunpack.c.h.b16 %v560
      %v642 = vunpack.c.l.b16 %v561
      %v643 = vunpack.c.h.b16 %v561
      %v644 = vunpack.c.l.b16 %v562
      %v645 = vunpack.c.h.b16 %v562
      %v646 = vunpack.c.l.b16 %v563
      %v647 = vunpack.c.h.b16 %v563
      %v648 = vunpack.c.l.b16 %v564
      %v649 = vunpack.c.h.b16 %v564
      %v650 = vunpack.c.l.b16 %v565
      %v651 = vunpack.c.h.b16 %v565
      %v652 = vunpack.c.l.b16 %v566
      %v653 = vunpack.c.h.b16 %v566
      %v654 = vunpack.c.l.b16 %v567
      %v655 = vunpack.c.h.b16 %v567
      %v656 = vunpack.c.l.b16 %v568
      %v657 = vunpack.c.h.b16 %v568
      %v658 = vunpack.c.l.b16 %v569
      %v659 = vunpack.c.h.b16 %v569
      %v660 = vunpack.c.l.b16 %v570
      %v661 = vunpack.c.h.b16 %v570
      %v662 = vunpack.c.l.b16 %v571
      %v663 = vunpack.c.h.b16 %v571
      %v664 = vunpack.c.l.b16 %v572
      %v665 = vunpack.c.h.b16 %v572
      %v666 = vunpack.c.l.b16 %v573
      %v667 = vunpack.c.h.b16 %v573
      %v668 = vunpack.c.l.b16 %v574
      %v669 = vunpack.c.h.b16 %v574
      %v670 = vunpack.c.l.b16 %v575
      %v671 = vunpack.c.h.b16 %v575
      %v672 = vunpack.c.l.b16 %v576
      %v673 = vunpack.c.h.b16 %v576
      %v674 = vunpack.c.l.b16 %v577
      %v675 = vunpack.c.h.b16 %v577
      %v676 = vunpack.c.l.b16 %v578
      %v677 = vunpack.c.h.b16 %v578
      %v678 = vunpack.c.l.b16 %v579
      %v679 = vunpack.c.h.b16 %v579
      %v680 = vunpack.c.l.b16 %v580
      %v681 = vunpack.c.h.b16 %v580
      %v682 = vunpack.c.l.b16 %v581
      %v683 = vunpack.c.h.b16 %v581
      %v684 = vunpack.c.l.b16 %v582
      %v685 = vunpack.c.h.b16 %v582
      %v686 = vunpack.c.l.b16 %v583
      %v687 = vunpack.c.h.b16 %v583
      %v688 = vunpack.c.l.b16 %v584
      %v689 = vunpack.c.h.b16 %v584
      %v690 = vunpack.c.l.b16 %v585
      %v691 = vunpack.c.h.b16 %v585
      %v692 = vunpack.c.l.b16 %v586
      %v693 = vunpack.c.h.b16 %v586
      %v694 = vunpack.c.l.b16 %v587
      %v695 = vunpack.c.h.b16 %v587
      %v696 = vpack.c.b16 %v634, %v632
      %v697 = vpack.c.b16 %v635, %v633
      %v698 = vpack.c.b16 %v638, %v636
      %v699 = vpack.c.b16 %v639, %v637
      %v700 = vpack.c.b16 %v642, %v640
      %v701 = vpack.c.b16 %v643, %v641
      %v702 = vpack.c.b16 %v646, %v644
      %v703 = vpack.c.b16 %v647, %v645
      %v704 = vpack.c.b16 %v650, %v648
      %v705 = vpack.c.b16 %v651, %v649
      %v706 = vpack.c.b16 %v654, %v652
      %v707 = vpack.c.b16 %v655, %v653
      %v708 = vpack.c.b16 %v658, %v656
      %v709 = vpack.c.b16 %v659, %v657
      %v710 = vpack.c.b16 %v662, %v660
      %v711 = vpack.c.b16 %v663, %v661
      %v712 = vpack.c.b16 %v666, %v664
      %v713 = vpack.c.b16 %v667, %v665
      %v714 = vpack.c.b16 %v670, %v668
      %v715 = vpack.c.b16 %v671, %v669
      %v716 = vpack.c.b16 %v674, %v672
      %v717 = vpack.c.b16 %v675, %v673
      %v718 = vpack.c.b16 %v678, %v676
      %v719 = vpack.c.b16 %v679, %v677
      %v720 = vpack.c.b16 %v682, %v680
      %v721 = vpack.c.b16 %v683, %v681
      %v722 = vpack.c.b16 %v686, %v684
      %v723 = vpack.c.b16 %v687, %v685
      %v724 = vpack.c.b16 %v690, %v688
      %v725 = vpack.c.b16 %v691, %v689
      %v726 = vpack.c.b16 %v694, %v692
      %v727 = vpack.c.b16 %v695, %v693
      %760 = vmatprep.subr.bf16.mxu0 %v711
      %761 = vmatpush1.bf16.msra.mxu0 %v710
      %762 = vmatprep.subr.bf16.mxu0 %v709
      %763 = vmatpush1.bf16.msra.mxu0 %v708
      %764 = vmatprep.subr.bf16.mxu0 %v707
      %765 = vmatpush1.bf16.msra.mxu0 %v706
      %766 = vmatprep.subr.bf16.mxu0 %v705
      %767 = vmatpush1.bf16.msra.mxu0 %v704
      %768 = vmatprep.subr.bf16.mxu0 %v703
      %769 = vmatpush1.bf16.msra.mxu0 %v702
      %770 = vmatprep.subr.bf16.mxu0 %v701
      %771 = vmatpush1.bf16.msra.mxu0 %v700
      %772 = vmatprep.subr.bf16.mxu0 %v699
      %773 = vmatpush1.bf16.msra.mxu0 %v698
      %774 = vmatprep.subr.bf16.mxu0 %v697
      %775 = vmatpush1.bf16.msra.mxu0 %v696
      %776 = vmatprep.subr.bf16.mxu0 %v727
      %777 = vmatpush2.bf16.msra.mxu0 %v726
      %778 = vmatprep.subr.bf16.mxu0 %v725
      %779 = vmatpush2.bf16.msra.mxu0 %v724
      %780 = vmatprep.subr.bf16.mxu0 %v723
      %781 = vmatpush2.bf16.msra.mxu0 %v722
      %782 = vmatprep.subr.bf16.mxu0 %v721
      %783 = vmatpush2.bf16.msra.mxu0 %v720
      %784 = vmatprep.subr.bf16.mxu0 %v719
      %785 = vmatpush2.bf16.msra.mxu0 %v718
      %786 = vmatprep.subr.bf16.mxu0 %v717
      %787 = vmatpush2.bf16.msra.mxu0 %v716
      %788 = vmatprep.subr.bf16.mxu0 %v715
      %789 = vmatpush2.bf16.msra.mxu0 %v714
      %790 = vmatprep.subr.bf16.mxu0 %v713
      %791 = vmatpush2.bf16.msra.mxu0 %v712
      %792 = vmatprep.mubr.bf16.mxu0 %v537
      %793 = vmatmul.mubr.bf16.gmra.mxu0 %v536
      %v794 = vpop.f32.mrf.mxu0
      %v795 = vadd.f32 %v593, %v794
      %v796 = vpop.f32.mrf.mxu0
      %v797 = vadd.f32 %v597, %v796
      %v798 = vpop.f32.mrf.mxu0
      %v799 = vadd.f32 %v593, %v798
      %v800 = vpop.f32.mrf.mxu0
      %v801 = vadd.f32 %v597, %v800
      %802 = vmatprep.mubr.bf16.mxu0 %v539
      %803 = vmatmul.mubr.bf16.gmra.mxu0 %v538
      %v804 = vpop.f32.mrf.mxu0
      %v805 = vadd.f32 %v593, %v804
      %v806 = vpop.f32.mrf.mxu0
      %v807 = vadd.f32 %v597, %v806
      %v808 = vpop.f32.mrf.mxu0
      %v809 = vadd.f32 %v593, %v808
      %v810 = vpop.f32.mrf.mxu0
      %v811 = vadd.f32 %v597, %v810
      %812 = vmatprep.mubr.bf16.mxu0 %v541
      %813 = vmatmul.mubr.bf16.gmra.mxu0 %v540
      %v814 = vpop.f32.mrf.mxu0
      %v815 = vadd.f32 %v593, %v814
      %v816 = vpop.f32.mrf.mxu0
      %v817 = vadd.f32 %v597, %v816
      %v818 = vpop.f32.mrf.mxu0
      %v819 = vadd.f32 %v593, %v818
      %v820 = vpop.f32.mrf.mxu0
      %v821 = vadd.f32 %v597, %v820
      %822 = vmatprep.mubr.bf16.mxu0 %v543
      %823 = vmatmul.mubr.bf16.gmra.mxu0 %v542
      %v824 = vpop.f32.mrf.mxu0
      %v825 = vadd.f32 %v593, %v824
      %v826 = vpop.f32.mrf.mxu0
      %v827 = vadd.f32 %v597, %v826
      %v828 = vpop.f32.mrf.mxu0
      %v829 = vadd.f32 %v593, %v828
      %v830 = vpop.f32.mrf.mxu0
      %v831 = vadd.f32 %v597, %v830
      %832 = vmatprep.mubr.bf16.mxu0 %v545
      %833 = vmatmul.mubr.bf16.gmra.mxu0 %v544
      %v834 = vpop.f32.mrf.mxu0
      %v835 = vadd.f32 %v593, %v834
      %v836 = vpop.f32.mrf.mxu0
      %v837 = vadd.f32 %v597, %v836
      %v838 = vpop.f32.mrf.mxu0
      %v839 = vadd.f32 %v593, %v838
      %v840 = vpop.f32.mrf.mxu0
      %v841 = vadd.f32 %v597, %v840
      %842 = vmatprep.mubr.bf16.mxu0 %v547
      %843 = vmatmul.mubr.bf16.gmra.mxu0 %v546
      %v844 = vpop.f32.mrf.mxu0
      %v845 = vadd.f32 %v593, %v844
      %v846 = vpop.f32.mrf.mxu0
      %v847 = vadd.f32 %v597, %v846
      %v848 = vpop.f32.mrf.mxu0
      %v849 = vadd.f32 %v593, %v848
      %v850 = vpop.f32.mrf.mxu0
      %v851 = vadd.f32 %v597, %v850
      %852 = vmatprep.mubr.bf16.mxu0 %v549
      %853 = vmatmul.mubr.bf16.gmra.mxu0 %v548
      %v854 = vpop.f32.mrf.mxu0
      %v855 = vadd.f32 %v593, %v854
      %v856 = vpop.f32.mrf.mxu0
      %v857 = vadd.f32 %v597, %v856
      %v858 = vpop.f32.mrf.mxu0
      %v859 = vadd.f32 %v593, %v858
      %v860 = vpop.f32.mrf.mxu0
      %v861 = vadd.f32 %v597, %v860
      %862 = vmatprep.mubr.bf16.mxu0 %v551
      %863 = vmatmul.mubr.bf16.gmra.mxu0 %v550
      %v864 = vpop.f32.mrf.mxu0
      %v865 = vadd.f32 %v593, %v864
      %v866 = vpop.f32.mrf.mxu0
      %v867 = vadd.f32 %v597, %v866
      %v868 = vpop.f32.mrf.mxu0
      %v869 = vadd.f32 %v593, %v868
      %v870 = vpop.f32.mrf.mxu0
      %v871 = vadd.f32 %v597, %v870
      %872 = vmatprep.mubr.bf16.mxu0 %v553
      %873 = vmatmul.mubr.bf16.gmra.mxu0 %v552
      %v874 = vpop.f32.mrf.mxu0
      %v875 = vadd.f32 %v593, %v874
      %v876 = vpop.f32.mrf.mxu0
      %v877 = vadd.f32 %v597, %v876
      %v878 = vpop.f32.mrf.mxu0
      %v879 = vadd.f32 %v593, %v878
      %v880 = vpop.f32.mrf.mxu0
      %v881 = vadd.f32 %v597, %v880
      %882 = vmatprep.mubr.bf16.mxu0 %v555
      %883 = vmatmul.mubr.bf16.gmra.mxu0 %v554
      %v884 = vpop.f32.mrf.mxu0
      %v885 = vadd.f32 %v593, %v884
      %v886 = vpop.f32.mrf.mxu0
      %v887 = vadd.f32 %v597, %v886
      %v888 = vpop.f32.mrf.mxu0
      %v889 = vpop.f32.mrf.mxu0
      %890 = vdwg.mxu0
      %v891 = vmax.f32 %v795, 0.0
      %v892 = vmax.f32 %v797, 0.0
      %v893 = vmax.f32 %v799, 0.0
      %v894 = vmax.f32 %v801, 0.0
      %v895 = vmax.f32 %v805, 0.0
      %v896 = vmax.f32 %v807, 0.0
      %v897 = vmax.f32 %v809, 0.0
      %v898 = vmax.f32 %v811, 0.0
      %v899 = vmax.f32 %v815, 0.0
      %v900 = vmax.f32 %v817, 0.0
      %v901 = vmax.f32 %v819, 0.0
      %v902 = vmax.f32 %v821, 0.0
      %v903 = vmax.f32 %v825, 0.0
      %v904 = vmax.f32 %v827, 0.0
      %v905 = vmax.f32 %v829, 0.0
      %v906 = vmax.f32 %v831, 0.0
      %v907 = vmax.f32 %v835, 0.0
      %v908 = vmax.f32 %v837, 0.0
      %v909 = vmax.f32 %v839, 0.0
      %v910 = vmax.f32 %v841, 0.0
      %v911 = vmax.f32 %v845, 0.0
      %v912 = vmax.f32 %v847, 0.0
      %v913 = vmax.f32 %v849, 0.0
      %v914 = vmax.f32 %v851, 0.0
      %v915 = vmax.f32 %v855, 0.0
      %v916 = vmax.f32 %v857, 0.0
      %v917 = vmax.f32 %v859, 0.0
      %v918 = vmax.f32 %v861, 0.0
      %v919 = vmax.f32 %v865, 0.0
      %v920 = vmax.f32 %v867, 0.0
      %v921 = vmax.f32 %v869, 0.0
      %v922 = vmax.f32 %v871, 0.0
      %v923 = vmax.f32 %v875, 0.0
      %v924 = vmax.f32 %v877, 0.0
      %v925 = vmax.f32 %v879, 0.0
      %v926 = vmax.f32 %v881, 0.0
      %v927 = vmax.f32 %v885, 0.0
      %v928 = vmax.f32 %v887, 0.0
      %v929 = vpack.c.bf16 %v893, %v891
      %v930 = vpack.c.bf16 %v894, %v892
      %v931 = vpack.c.bf16 %v897, %v895
      %v932 = vpack.c.bf16 %v898, %v896
      %v933 = vpack.c.bf16 %v901, %v899
      %v934 = vpack.c.bf16 %v902, %v900
      %v935 = vpack.c.bf16 %v905, %v903
      %v936 = vpack.c.bf16 %v906, %v904
      %v937 = vpack.c.bf16 %v909, %v907
      %v938 = vpack.c.bf16 %v910, %v908
      %v939 = vpack.c.bf16 %v913, %v911
      %v940 = vpack.c.bf16 %v914, %v912
      %v941 = vpack.c.bf16 %v917, %v915
      %v942 = vpack.c.bf16 %v918, %v916
      %v943 = vpack.c.bf16 %v921, %v919
      %v944 = vpack.c.bf16 %v922, %v920
      %v945 = vpack.c.bf16 %v925, %v923
      %v946 = vpack.c.bf16 %v926, %v924
      %v947 = vpack.c.bf16 %v927, %v927
      %v948 = vpack.c.bf16 %v928, %v928
      %v949 = vld [vmem:[%s5] sm:$0x3]
      %v950 = vld [vmem:[#allocation2] sm:$0x1]
      %952 = vset.pattern.permute.xlu0 0
      %953 = vperm.xlu0 %952, %v950
      %v954 = vpop.permute.xlu0 %953
      %v956 = vlaneseq
      %v957 = vshrl.u32 %v956, 7
      %v958 = vsub.s32 0, %v957
      %v959 = vrot.slane %v954, %v958
      %v962 = vunpack.c.l.s4 1966171168
      %v963 = vunpack.c.0.s8 %v962
      %v964 = vlaneseq
      %v965 = vshrl.u32 %v964, 7
      %v966 = vsub.s32 %v963, %v965
      %v967 = vrot.slane %v949, %v966
      %v968 = vcombine.high %v967, %v967
      %v970 = vunpack.c.l.s4 1966171168
      %v971 = vunpack.c.0.s8 %v970
      %v972 = vlaneseq
      %v973 = vshrl.u32 %v972, 7
      %v974 = vsub.s32 %v971, %v973
      %v975 = vrot.slane %v967, %v974
      %v977 = vunpack.c.l.s4 1966171168
      %v978 = vunpack.c.0.s8 %v977
      %v979 = vlaneseq
      %v980 = vshrl.u32 %v979, 7
      %v981 = vsub.s32 %v978, %v980
      %v982 = vrot.slane %v968, %v981
      %985 = vmatprep.subr.bf16.mxu0 %v944
      %986 = vmatpush1.bf16.xpose.msra.mxu0 %v943
      %987 = vmatprep.subr.bf16.mxu0 %v942
      %988 = vmatpush1.bf16.xpose.msra.mxu0 %v941
      %989 = vmatprep.subr.bf16.mxu0 %v940
      %990 = vmatpush1.bf16.xpose.msra.mxu0 %v939
      %991 = vmatprep.subr.bf16.mxu0 %v938
      %992 = vmatpush1.bf16.xpose.msra.mxu0 %v937
      %993 = vmatprep.subr.bf16.mxu0 %v936
      %994 = vmatpush1.bf16.xpose.msra.mxu0 %v935
      %995 = vmatprep.subr.bf16.mxu0 %v934
      %996 = vmatpush1.bf16.xpose.msra.mxu0 %v933
      %997 = vmatprep.subr.bf16.mxu0 %v932
      %998 = vmatpush1.bf16.xpose.msra.mxu0 %v931
      %999 = vmatprep.subr.bf16.mxu0 %v930
      %1000 = vmatpush1.bf16.xpose.msra.mxu0 %v929
      %1001 = vmatprep.subr.bf16.mxu0 0
      %1002 = vmatpush2.bf16.xpose.msra.mxu0 0
      %1003 = vmatprep.subr.bf16.mxu0 0
      %1004 = vmatpush2.bf16.xpose.msra.mxu0 0
      %1005 = vmatprep.subr.bf16.mxu0 0
      %1006 = vmatpush2.bf16.xpose.msra.mxu0 0
      %1007 = vmatprep.subr.bf16.mxu0 0
      %1008 = vmatpush2.bf16.xpose.msra.mxu0 0
      %1009 = vmatprep.subr.bf16.mxu0 0
      %1010 = vmatpush2.bf16.xpose.msra.mxu0 0
      %1011 = vmatprep.subr.bf16.mxu0 0
      %1012 = vmatpush2.bf16.xpose.msra.mxu0 0
      %1013 = vmatprep.subr.bf16.mxu0 %v948
      %1014 = vmatpush2.bf16.xpose.msra.mxu0 %v947
      %1015 = vmatprep.subr.bf16.mxu0 %v946
      %1016 = vmatpush2.bf16.xpose.msra.mxu0 %v945
      %1017 = vmatprep.mubr.bf16.mxu0 %v982
      %1018 = vmatmul.mubr.bf16.gmra.mxu0 %v975
      %v1019 = vpop.f32.mrf.mxu0
      %v1020 = vadd.f32 %v959, %v1019
      %v1021 = vpop.f32.mrf.mxu0
      %v1022 = vadd.f32 %v959, %v1021
      %v1023 = vpop.f32.mrf.mxu0
      %v1024 = vpop.f32.mrf.mxu0
      %1025 = vdwg.mxu0
      %v1028 = vcombine.low %v1020, %v1022
      %v1030 = vunpack.c.l.s4 1966171168
      %v1031 = vunpack.c.0.s8 %v1030
      %v1032 = vlaneseq
      %v1033 = vshrl.u32 %v1032, 7
      %v1034 = vsub.s32 %v1031, %v1033
      %v1035 = vrot.slane %v1028, %v1034
      %v1037 = vunpack.c.l.s4 1966171168
      %v1038 = vunpack.c.0.s8 %v1037
      %v1039 = vlaneseq
      %v1040 = vshrl.u32 %v1039, 7
      %v1041 = vsub.s32 %v1038, %v1040
      %v1042 = vrot.slane %v1035, %v1041
      %v1044 = vlaneseq
      %vm1045 = vcmp.ge.s32.totalorder %v1044, 0
      %vm1046 = vcmp.lt.s32.totalorder %v1044, 152
      %vm1047 = vmand %vm1045, %vm1046
      %1048 = vst.msk [vmem:[%s280] sm:$0x3] %vm1047, %v1042
      %p1049 = scmp.lt.s32.totalorder %s20, 1
      %s1050 = scalar_select %p1049, %s20, 1
      %s1051 = smul.addr %s1050, 2
      %s1052 = scalar_lea.vmem %s7, %s1051
      // Predicated region
      $region49: #{value_network_forward.1} parent=47 // pred_check
        %p1053 = pneg %p190
      $region50: #{value_network_forward.1} parent=47 // pred_check_branch
        %1055 = sbr.rel (%p1053) target = $region52
      $region51: #{value_network_forward.1} parent=47 // pred_region
        _
      $region52: #{value_network_forward.1} parent=47 // pred_fallthru
        _
    $region48: #{value_network_forward.1} parent=5 // pred_fallthru
      _
    %p1056 = scmp.le.s32.totalorder 2, %s15
    // Predicated region
    $region53: #{value_network_forward.1} parent=5 // pred_check
      %p1057 = pneg %p1056
    $region54: #{value_network_forward.1} parent=5 // pred_check_branch
      %1059 = sbr.rel (%p1057) target = $region56
    $region55: #{value_network_forward.1} parent=5 // pred_region
      %s1060 = ssub.s32 %s15, 2
      // Predicated region
      $region57: #{value_network_forward.1} parent=55 // pred_check
        %p1061 = pneg %p196
      $region58: #{value_network_forward.1} parent=55 // pred_check_branch
        %1063 = sbr.rel (%p1061) target = $region60
      $region59: #{value_network_forward.1} parent=55 // pred_region
        %p1064 = scmp.lt.s32.totalorder %s21, 1
        %s1065 = scalar_select %p1064, %s21, 1
        %s1066 = smul.addr %s1065, 2
        %s1067 = scalar_lea.vmem %s7, %s1066
      $region60: #{value_network_forward.1} parent=55 // pred_fallthru
        _
    $region56: #{value_network_forward.1} parent=5 // pred_fallthru
      _
  $region6: #{value_network_forward.1} parent=0 // loop_footer
    %s19 = sadd.s32 1, %s15
  $region7: #{value_network_forward.1} parent=0 // loop_footer_branch
    %14 = sbr.rel target = $region3
  $region8: #{value_network_forward.1} parent=0 // loop_exit
    _

</llo_original>
